<compile_context>
chip_gen: v7x
topology: tpu7x:2x2x1
jax: 0.10.0
libtpu: 0.0.40
codegen_flags: <defaults>
</compile_context>

<pallas_src>
import jax
import jax.numpy as jnp
from jax.experimental import pallas as pl
from jax.experimental.pallas import tpu as pltpu


def _round_up(x, m):
    return ((x + m - 1) // m) * m


def _gemm_bias_relu_kernel(p_ref, w_ref, b_ref, o_ref):
    # p_ref: (tm, K_pad)  w_ref: (K_pad, toc)  b_ref: (1, toc)  o_ref: (tm, toc)
    acc = jnp.dot(p_ref[...], w_ref[...], preferred_element_type=jnp.float32)
    o_ref[...] = jnp.maximum(acc + b_ref[...], 0.0).astype(o_ref.dtype)


def _im2col(x, kh=3, kw=3):
    # NCHW -> (N*Ho*Wo, C*kh*kw); feature index = c*(kh*kw) + i*kw + j, which
    # matches PyTorch's weight.reshape(OC, C*kh*kw) flattening.
    N, C, H, W = x.shape
    Ho, Wo = H - kh + 1, W - kw + 1
    cols = [x[:, :, i:i + Ho, j:j + Wo] for i in range(kh) for j in range(kw)]
    patches = jnp.stack(cols, axis=2)             # (N, C, kh*kw, Ho, Wo)
    patches = patches.transpose(0, 3, 4, 1, 2)    # (N, Ho, Wo, C, kh*kw)
    return patches.reshape(N * Ho * Wo, C * kh * kw), Ho, Wo


def conv_block_forward(x, weight, bias, *, tm=512, compute_dtype=None):
    """x: (N, C, H, W); weight: (OC, C, 3, 3); bias: (OC,) -> (N, OC, H-2, W-2)."""
    N, C, H, W = x.shape
    OC = weight.shape[0]

    patches, Ho, Wo = _im2col(x)                  # (M, K), K = 9*C
    M, K = patches.shape

    if compute_dtype is None:
        compute_dtype = x.dtype                   # jnp.bfloat16 on v6e/v7x for MXU peak
    bc = jnp.dtype(compute_dtype).itemsize
    bo = jnp.dtype(x.dtype).itemsize

    # --- Layout padding -----------------------------------------------------
    # K: pad only to the sublane multiple (the K block is the full extent).
    sub = 16 if bc == 2 else 8
    K_pad = _round_up(K, sub)

    # OC tile: keep the whole padded OC resident when the weight slab is small
    # (true for essentially every 3x3 conv layer); otherwise block at 256.
    if K_pad * _round_up(OC, 128) * bc <= 8 * 1024 * 1024:
        toc = _round_up(OC, 128)
    else:
        toc = 256
        # TODO(synk): add a K-blocked accumulator fallback if K_pad*256 per
        # block ever exceeds the VMEM budget (not reachable for 3x3 convs).
    OC_pad = _round_up(OC, toc)

    # M tile: big tiles amortize the ~0.35us per-grid-step overhead; shrink if
    # the double-buffered footprint would blow the (v7x-safe) VMEM budget.
    def vmem_need(tm_):
        return 2 * (tm_ * K_pad * bc + K_pad * toc * bc + toc * 4
                    + tm_ * toc * bo)
    while vmem_need(tm) > 32 * 1024 * 1024 and tm > 128:
        tm //= 2
    tm = min(tm, _round_up(M, sub))
    M_pad = _round_up(M, tm)

    vmem_limit = min(max(int(1.5 * vmem_need(tm)) + (4 << 20), 16 << 20),
                     40 << 20)

    # --- Padded operands (zero padding is numerically exact) -----------------
    p = jnp.pad(patches.astype(compute_dtype),
                ((0, M_pad - M), (0, K_pad - K)))
    w = jnp.pad(weight.reshape(OC, K).T.astype(compute_dtype),
                ((0, K_pad - K), (0, OC_pad - OC)))
    b = jnp.pad(bias.astype(jnp.float32), (0, OC_pad - OC)).reshape(1, OC_pad)

    grid = (OC_pad // toc, M_pad // tm)           # OC outer -> weights resident

    out_flat = pl.pallas_call(
        _gemm_bias_relu_kernel,
        out_shape=jax.ShapeDtypeStruct((M_pad, OC_pad), x.dtype),
        grid_spec=pltpu.PrefetchScalarGridSpec(
            num_scalar_prefetch=0,
            grid=grid,
            in_specs=[
                # LHS patch tile changes every inner (M) step.
                pl.BlockSpec((tm, K_pad), lambda j, i: (i, 0)),
                # Weight / bias blocks depend only on the outer OC axis ->
                # fetched once per OC tile and VMEM-resident across all M tiles.
                pl.BlockSpec((K_pad, toc), lambda j, i: (0, j)),
                pl.BlockSpec((1, toc), lambda j, i: (0, j)),
            ],
            out_specs=pl.BlockSpec((tm, toc), lambda j, i: (i, j)),
        ),
        compiler_params=pltpu.CompilerParams(
            # No carried reduction across the grid: both axes independent
            # (megacore-shardable on v7x; a plain loop on v5e/v6e).
            dimension_semantics=("parallel", "parallel"),
            vmem_limit_bytes=vmem_limit,
        ),
    )(p, w, b)

    # Crop padding, restore NCHW (see TODO above about NHWC consumers).
    out = out_flat[:M, :OC].reshape(N, Ho, Wo, OC)
    return out.transpose(0, 3, 1, 2)


if __name__ == "__main__":
    key = jax.random.PRNGKey(0)
    kx, kw, kb = jax.random.split(key, 3)

    N, IN_CH, OUT_CH, H, W = 2, 4, 8, 16, 16
    x = jax.random.normal(kx, (N, IN_CH, H, W), dtype=jnp.float32)

    # Deterministic parameter init (shapes match nn.Conv2d(in_ch, out_ch, 3)).
    fan_in = IN_CH * 3 * 3
    bound = 1.0 / jnp.sqrt(fan_in)
    weight = jax.random.uniform(kw, (OUT_CH, IN_CH, 3, 3),
                                minval=-bound, maxval=bound, dtype=jnp.float32)
    bias = jax.random.uniform(kb, (OUT_CH,),
                              minval=-bound, maxval=bound, dtype=jnp.float32)

    out = conv_block_forward(x, weight, bias)
    jax.block_until_ready(out)

    # Reference check against XLA conv (valid padding) + ReLU.
    ref = jax.lax.conv_general_dilated(
        x, weight, window_strides=(1, 1), padding="VALID",
        dimension_numbers=("NCHW", "OIHW", "NCHW"))
    ref = jnp.maximum(ref + bias[None, :, None, None], 0.0)
    assert out.shape == (N, OUT_CH, H - 2, W - 2)
    assert jnp.allclose(out, ref, atol=1e-4, rtol=1e-4)

    print("KERNEL_OK")
</pallas_src>

<mosaic_0001>
module attributes {stable_mosaic.version = 11 : i64} {
  func.func @_gemm_bias_relu_kernel(%arg0: i32, %arg1: i32, %arg2: memref<392x40xf32, #tpu.memory_space<vmem>>, %arg3: memref<40x128xf32, #tpu.memory_space<vmem>>, %arg4: memref<1x128xf32, #tpu.memory_space<vmem>>, %arg5: memref<392x128xf32, #tpu.memory_space<vmem>>) attributes {dimension_semantics = [#tpu.dimension_semantics<parallel>, #tpu.dimension_semantics<parallel>], iteration_bounds = array<i64: 1, 1>, scalar_prefetch = 0 : i64, scratch_operands = 0 : i64, tpu.core_type = #tpu.core_type<tc>, window_params = [{transform_indices = @transform_0, window_bounds = array<i64: 392, 40>}, {transform_indices = @transform_1, window_bounds = array<i64: 40, 128>}, {transform_indices = @transform_2, window_bounds = array<i64: 1, 128>}, {transform_indices = @transform_3, window_bounds = array<i64: 392, 128>}]} {
    %c0 = arith.constant 0 : index
    %c0_0 = arith.constant 0 : index
    %0 = vector.load %arg2[%c0, %c0_0] : memref<392x40xf32, #tpu.memory_space<vmem>>, vector<392x40xf32>
    %c0_1 = arith.constant 0 : index
    %c0_2 = arith.constant 0 : index
    %1 = vector.load %arg3[%c0_1, %c0_2] : memref<40x128xf32, #tpu.memory_space<vmem>>, vector<40x128xf32>
    %cst = arith.constant dense<0.000000e+00> : vector<392x128xf32>
    %2 = tpu.matmul %0, %1, %cst {dimension_numbers = #tpu.dot_dimension_numbers<[1], [0], [0], [1], [0, 0, 1, 1], [], []>} : vector<392x40xf32>, vector<40x128xf32>, vector<392x128xf32> -> vector<392x128xf32>
    %c0_3 = arith.constant 0 : index
    %c0_4 = arith.constant 0 : index
    %3 = vector.load %arg4[%c0_3, %c0_4] : memref<1x128xf32, #tpu.memory_space<vmem>>, vector<1x128xf32>
    %4 = vector.broadcast %3 : vector<1x128xf32> to vector<392x128xf32>
    %5 = arith.addf %2, %4 : vector<392x128xf32>
    %cst_5 = arith.constant 0.000000e+00 : f32
    %6 = vector.broadcast %cst_5 : f32 to vector<392x128xf32>
    %7 = arith.maximumf %5, %6 : vector<392x128xf32>
    %c0_6 = arith.constant 0 : index
    %c0_7 = arith.constant 0 : index
    %8 = vector.load %arg5[%c0_6, %c0_7] : memref<392x128xf32, #tpu.memory_space<vmem>>, vector<392x128xf32>
    tpu.vector_store %arg5[%c0_6, %c0_7], %7 {strides = array<i32>} : memref<392x128xf32, #tpu.memory_space<vmem>>, vector<392x128xf32>,
    return
  }
  func.func @transform_0(%arg0: i32, %arg1: i32) -> (i32, i32) {
    %c0_i32 = arith.constant 0 : i32
    %c0_i32_0 = arith.constant 0 : i32
    return %arg1, %c0_i32 : i32, i32
  }
  func.func @transform_1(%arg0: i32, %arg1: i32) -> (i32, i32) {
    %c0_i32 = arith.constant 0 : i32
    %c0_i32_0 = arith.constant 0 : i32
    return %c0_i32, %arg0 : i32, i32
  }
  func.func @transform_2(%arg0: i32, %arg1: i32) -> (i32, i32) {
    %c0_i32 = arith.constant 0 : i32
    %c0_i32_0 = arith.constant 0 : i32
    return %c0_i32, %arg0 : i32, i32
  }
  func.func @transform_3(%arg0: i32, %arg1: i32) -> (i32, i32) {
    %c0_i32 = arith.constant 0 : i32
    return %arg1, %arg0 : i32, i32
  }
}

</mosaic_0001>

<llo_original>
// kernel: tpu_custom_call.1
$region0: #{tpu_custom_call.1}
  #allocation0 [shape = 'u32[]', space=smem, size = 0x4, offset = 0x4, fixed_abs, tag = 'smem constant byte address 0x4 - core index']
  #allocation1 [shape = 'u32[144,128]{1,0:T(1,128)}', space=vmem, size = 0x12000, scoped, tag = 'internal scratch']
  %s0 = inlined_call_operand.vmem [shape: f32[392,40], index: 0, kind: input, shape index: {}]
  %s1 = inlined_call_operand.vmem [shape: f32[40,128], index: 1, kind: input, shape index: {}]
  %s2 = inlined_call_operand.vmem [shape: f32[1,128], index: 2, kind: input, shape index: {}]
  %s3 = inlined_call_operand.hbm [shape: f32[392,128], index: 3, kind: output, shape index: {}]
  %s4 = sld [smem:[#allocation0]]
  $region22: #{tpu_custom_call.1} parent=0
    _
  %s6 = ssub.s32 1, %s4
  %s7 = scalar_select 0, %s6, %s4
  $region1: #{tpu_custom_call.1} parent=0
    #allocation2 [shape = 'u8[200704]{0}', space=vmem, size = 0x31000, scoped, tag = 'output window, operand 0, single buffered']
    #allocation3 [shape = 's32[1]{0}', space=sflag, size = 0x4, scoped, tag = 'scoped memory for tpu_custom_call.1']
    %8 = vsyncpa [#allocation3], 0
    // Predicated region
    $region2: #{tpu_custom_call.1} parent=1 // pred_check
      _
    $region3: #{tpu_custom_call.1} parent=1 // pred_check_branch
      %10 = sbr.rel (0) target = $region5
    $region4: #{tpu_custom_call.1} parent=1 // pred_region
      _
    $region5: #{tpu_custom_call.1} parent=1 // pred_fallthru
      _
    // Predicated region
    $region6: #{tpu_custom_call.1} parent=1 // pred_check
      _
    $region7: #{tpu_custom_call.1} parent=1 // pred_check_branch
      %12 = sbr.rel (0) target = $region9
    $region8: #{tpu_custom_call.1} parent=1 // pred_region
      _
    $region9: #{tpu_custom_call.1} parent=1 // pred_fallthru
      _
    // Predicated region
    $region10: #{tpu_custom_call.1} parent=1 // pred_check
      _
    $region11: #{tpu_custom_call.1} parent=1 // pred_check_branch
      %14 = sbr.rel (0) target = $region13
    $region12: #{tpu_custom_call.1} parent=1 // pred_region
      _
    $region13: #{tpu_custom_call.1} parent=1 // pred_fallthru
      _
    %v15 = vld [vmem:[%s0] sm:$0xff]
    %v16 = vld [vmem:[%s0 + $0x8] sm:$0xff]
    %v17 = vld [vmem:[%s0 + $0x10] sm:$0xff]
    %v18 = vld [vmem:[%s0 + $0x18] sm:$0xff]
    %v19 = vld [vmem:[%s0 + $0x20] sm:$0xff]
    %v20 = vld [vmem:[%s0 + $0x28] sm:$0xff]
    %v21 = vld [vmem:[%s0 + $0x30] sm:$0xff]
    %v22 = vld [vmem:[%s0 + $0x38] sm:$0xff]
    %v23 = vld [vmem:[%s0 + $0x40] sm:$0xff]
    %v24 = vld [vmem:[%s0 + $0x48] sm:$0xff]
    %v25 = vld [vmem:[%s0 + $0x50] sm:$0xff]
    %v26 = vld [vmem:[%s0 + $0x58] sm:$0xff]
    %v27 = vld [vmem:[%s0 + $0x60] sm:$0xff]
    %v28 = vld [vmem:[%s0 + $0x68] sm:$0xff]
    %v29 = vld [vmem:[%s0 + $0x70] sm:$0xff]
    %v30 = vld [vmem:[%s0 + $0x78] sm:$0xff]
    %v31 = vld [vmem:[%s0 + $0x80] sm:$0xff]
    %v32 = vld [vmem:[%s0 + $0x88] sm:$0xff]
    %v33 = vld [vmem:[%s0 + $0x90] sm:$0xff]
    %v34 = vld [vmem:[%s0 + $0x98] sm:$0xff]
    %v35 = vld [vmem:[%s0 + $0xa0] sm:$0xff]
    %v36 = vld [vmem:[%s0 + $0xa8] sm:$0xff]
    %v37 = vld [vmem:[%s0 + $0xb0] sm:$0xff]
    %v38 = vld [vmem:[%s0 + $0xb8] sm:$0xff]
    %v39 = vld [vmem:[%s0 + $0xc0] sm:$0xff]
    %v40 = vld [vmem:[%s0 + $0xc8] sm:$0xff]
    %v41 = vld [vmem:[%s0 + $0xd0] sm:$0xff]
    %v42 = vld [vmem:[%s0 + $0xd8] sm:$0xff]
    %v43 = vld [vmem:[%s0 + $0xe0] sm:$0xff]
    %v44 = vld [vmem:[%s0 + $0xe8] sm:$0xff]
    %v45 = vld [vmem:[%s0 + $0xf0] sm:$0xff]
    %v46 = vld [vmem:[%s0 + $0xf8] sm:$0xff]
    %v47 = vld [vmem:[%s0 + $0x100] sm:$0xff]
    %v48 = vld [vmem:[%s0 + $0x108] sm:$0xff]
    %v49 = vld [vmem:[%s0 + $0x110] sm:$0xff]
    %v50 = vld [vmem:[%s0 + $0x118] sm:$0xff]
    %v51 = vld [vmem:[%s0 + $0x120] sm:$0xff]
    %v52 = vld [vmem:[%s0 + $0x128] sm:$0xff]
    %v53 = vld [vmem:[%s0 + $0x130] sm:$0xff]
    %v54 = vld [vmem:[%s0 + $0x138] sm:$0xff]
    %v55 = vld [vmem:[%s0 + $0x140] sm:$0xff]
    %v56 = vld [vmem:[%s0 + $0x148] sm:$0xff]
    %v57 = vld [vmem:[%s0 + $0x150] sm:$0xff]
    %v58 = vld [vmem:[%s0 + $0x158] sm:$0xff]
    %v59 = vld [vmem:[%s0 + $0x160] sm:$0xff]
    %v60 = vld [vmem:[%s0 + $0x168] sm:$0xff]
    %v61 = vld [vmem:[%s0 + $0x170] sm:$0xff]
    %v62 = vld [vmem:[%s0 + $0x178] sm:$0xff]
    %v63 = vld [vmem:[%s0 + $0x180] sm:$0xff]
    %v64 = vld [vmem:[%s1] sm:$0xff]
    %v65 = vld [vmem:[%s1 + $0x8] sm:$0xff]
    %v66 = vld [vmem:[%s1 + $0x10] sm:$0xff]
    %v67 = vld [vmem:[%s1 + $0x18] sm:$0xff]
    %v68 = vld [vmem:[%s1 + $0x20] sm:$0xff]
    %v69 = vld [vmem:[%s2] sm:$0x1]
    %v71 = vlaneseq
    %v72 = vshrl.u32 %v71, 7
    %v73 = vsub.s32 0, %v72
    %v74 = vrot.slane %v69, %v73
    %vm76 = vcmask 326656
    %v78 = vsel %vm76, %v15, 0
    %v81 = vsel %vm76, %v16, 0
    %v84 = vsel %vm76, %v17, 0
    %v87 = vsel %vm76, %v18, 0
    %v90 = vsel %vm76, %v19, 0
    %v93 = vsel %vm76, %v20, 0
    %v96 = vsel %vm76, %v21, 0
    %v99 = vsel %vm76, %v22, 0
    %v102 = vsel %vm76, %v23, 0
    %v105 = vsel %vm76, %v24, 0
    %v108 = vsel %vm76, %v25, 0
    %v111 = vsel %vm76, %v26, 0
    %v114 = vsel %vm76, %v27, 0
    %v117 = vsel %vm76, %v28, 0
    %v120 = vsel %vm76, %v29, 0
    %v123 = vsel %vm76, %v30, 0
    %v126 = vsel %vm76, %v31, 0
    %v129 = vsel %vm76, %v32, 0
    %v132 = vsel %vm76, %v33, 0
    %v135 = vsel %vm76, %v34, 0
    %v138 = vsel %vm76, %v35, 0
    %v141 = vsel %vm76, %v36, 0
    %v144 = vsel %vm76, %v37, 0
    %v147 = vsel %vm76, %v38, 0
    %v150 = vsel %vm76, %v39, 0
    %v153 = vsel %vm76, %v40, 0
    %v156 = vsel %vm76, %v41, 0
    %v159 = vsel %vm76, %v42, 0
    %v162 = vsel %vm76, %v43, 0
    %v165 = vsel %vm76, %v44, 0
    %v168 = vsel %vm76, %v45, 0
    %v171 = vsel %vm76, %v46, 0
    %v174 = vsel %vm76, %v47, 0
    %v177 = vsel %vm76, %v48, 0
    %v180 = vsel %vm76, %v49, 0
    %v183 = vsel %vm76, %v50, 0
    %v186 = vsel %vm76, %v51, 0
    %v189 = vsel %vm76, %v52, 0
    %v192 = vsel %vm76, %v53, 0
    %v195 = vsel %vm76, %v54, 0
    %v198 = vsel %vm76, %v55, 0
    %v201 = vsel %vm76, %v56, 0
    %v204 = vsel %vm76, %v57, 0
    %v207 = vsel %vm76, %v58, 0
    %v210 = vsel %vm76, %v59, 0
    %v213 = vsel %vm76, %v60, 0
    %v216 = vsel %vm76, %v61, 0
    %v219 = vsel %vm76, %v62, 0
    %v222 = vsel %vm76, %v63, 0
    %224 = vmatprep.subr.mxu0 0.0
    %225 = vmatpush1.msra.mxu0 %v64
    %226 = vmatprep.subr.mxu0 0.0
    %227 = vmatpush1.msra.mxu0 %v65
    %228 = vmatprep.subr.mxu0 0.0
    %229 = vmatpush1.msra.mxu0 %v66
    %230 = vmatprep.subr.mxu0 0.0
    %231 = vmatpush1.msra.mxu0 %v67
    %232 = vmatprep.subr.mxu0 0.0
    %233 = vmatpush1.msra.mxu0 %v68
    %234 = vmatprep.subr.mxu0 0.0
    %235 = vmatpush1.msra.mxu0 0.0
    %236 = vmatprep.subr.mxu0 0.0
    %237 = vmatpush1.msra.mxu0 0.0
    %238 = vmatprep.subr.mxu0 0.0
    %239 = vmatpush1.msra.mxu0 0.0
    %240 = vmatprep.subr.mxu0 0.0
    %241 = vmatpush1.msra.mxu0 0.0
    %242 = vmatprep.subr.mxu0 0.0
    %243 = vmatpush1.msra.mxu0 0.0
    %244 = vmatprep.subr.mxu0 0.0
    %245 = vmatpush1.msra.mxu0 0.0
    %246 = vmatprep.subr.mxu0 0.0
    %247 = vmatpush1.msra.mxu0 0.0
    %248 = vmatprep.subr.mxu0 0.0
    %249 = vmatpush1.msra.mxu0 0.0
    %250 = vmatprep.subr.mxu0 0.0
    %251 = vmatpush1.msra.mxu0 0.0
    %252 = vmatprep.subr.mxu0 0.0
    %253 = vmatpush1.msra.mxu0 0.0
    %254 = vmatprep.subr.mxu0 0.0
    %255 = vmatpush1.msra.mxu0 0.0
    %256 = vmatprep.subr.mxu0 0.0
    %257 = vmatpush1.msra.mxu0 0.0
    %258 = vmatprep.subr.mxu0 0.0
    %259 = vmatpush1.msra.mxu0 0.0
    %260 = vmatprep.subr.mxu0 0.0
    %261 = vmatpush1.msra.mxu0 0.0
    %262 = vmatprep.subr.mxu0 0.0
    %263 = vmatpush1.msra.mxu0 0.0
    %264 = vmatprep.subr.mxu0 0.0
    %265 = vmatpush1.msra.mxu0 0.0
    %266 = vmatprep.subr.mxu0 0.0
    %267 = vmatpush1.msra.mxu0 0.0
    %268 = vmatprep.subr.mxu0 0.0
    %269 = vmatpush1.msra.mxu0 0.0
    %270 = vmatprep.subr.mxu0 0.0
    %271 = vmatpush1.msra.mxu0 0.0
    %272 = vmatprep.subr.mxu0 0.0
    %273 = vmatpush1.msra.mxu0 0.0
    %274 = vmatprep.subr.mxu0 0.0
    %275 = vmatpush1.msra.mxu0 0.0
    %276 = vmatprep.subr.mxu0 0.0
    %277 = vmatpush1.msra.mxu0 0.0
    %278 = vmatprep.subr.mxu0 0.0
    %279 = vmatpush1.msra.mxu0 0.0
    %280 = vmatprep.subr.mxu0 0.0
    %281 = vmatpush1.msra.mxu0 0.0
    %282 = vmatprep.subr.mxu0 0.0
    %283 = vmatpush1.msra.mxu0 0.0
    %284 = vmatprep.subr.mxu0 0.0
    %285 = vmatpush1.msra.mxu0 0.0
    %286 = vmatprep.subr.mxu0 0.0
    %287 = vmatpush1.msra.mxu0 0.0
    %288 = vmatprep.mubr.f32.mxu0 0.0
    %289 = vmatmul.mubr.f32.gmra.mrb[0].mxu0 %v78
    %v290 = vpop.f32.mrb[0].mxu0
    %v291 = vadd.f32 %v74, %v290
    %v292 = vpop.f32.mrb[0].mxu0
    %293 = vmatprep.mubr.f32.mxu0 0.0
    %294 = vmatmul.mubr.f32.gmra.mrb[0].mxu0 %v81
    %v295 = vpop.f32.mrb[0].mxu0
    %v296 = vadd.f32 %v74, %v295
    %v297 = vpop.f32.mrb[0].mxu0
    %298 = vmatprep.mubr.f32.mxu0 0.0
    %299 = vmatmul.mubr.f32.gmra.mrb[0].mxu0 %v84
    %v300 = vpop.f32.mrb[0].mxu0
    %v301 = vadd.f32 %v74, %v300
    %v302 = vpop.f32.mrb[0].mxu0
    %303 = vmatprep.mubr.f32.mxu0 0.0
    %304 = vmatmul.mubr.f32.gmra.mrb[0].mxu0 %v87
    %v305 = vpop.f32.mrb[0].mxu0
    %v306 = vadd.f32 %v74, %v305
    %v307 = vpop.f32.mrb[0].mxu0
    %308 = vmatprep.mubr.f32.mxu0 0.0
    %309 = vmatmul.mubr.f32.gmra.mrb[0].mxu0 %v90
    %v310 = vpop.f32.mrb[0].mxu0
    %v311 = vadd.f32 %v74, %v310
    %v312 = vpop.f32.mrb[0].mxu0
    %313 = vmatprep.mubr.f32.mxu0 0.0
    %314 = vmatmul.mubr.f32.gmra.mrb[0].mxu0 %v93
    %v315 = vpop.f32.mrb[0].mxu0
    %v316 = vadd.f32 %v74, %v315
    %v317 = vpop.f32.mrb[0].mxu0
    %318 = vmatprep.mubr.f32.mxu0 0.0
    %319 = vmatmul.mubr.f32.gmra.mrb[0].mxu0 %v96
    %v320 = vpop.f32.mrb[0].mxu0
    %v321 = vadd.f32 %v74, %v320
    %v322 = vpop.f32.mrb[0].mxu0
    %323 = vmatprep.mubr.f32.mxu0 0.0
    %324 = vmatmul.mubr.f32.gmra.mrb[0].mxu0 %v99
    %v325 = vpop.f32.mrb[0].mxu0
    %v326 = vadd.f32 %v74, %v325
    %v327 = vpop.f32.mrb[0].mxu0
    %328 = vmatprep.mubr.f32.mxu0 0.0
    %329 = vmatmul.mubr.f32.gmra.mrb[0].mxu0 %v102
    %v330 = vpop.f32.mrb[0].mxu0
    %v331 = vadd.f32 %v74, %v330
    %v332 = vpop.f32.mrb[0].mxu0
    %333 = vmatprep.mubr.f32.mxu0 0.0
    %334 = vmatmul.mubr.f32.gmra.mrb[0].mxu0 %v105
    %v335 = vpop.f32.mrb[0].mxu0
    %v336 = vadd.f32 %v74, %v335
    %v337 = vpop.f32.mrb[0].mxu0
    %338 = vmatprep.mubr.f32.mxu0 0.0
    %339 = vmatmul.mubr.f32.gmra.mrb[0].mxu0 %v108
    %v340 = vpop.f32.mrb[0].mxu0
    %v341 = vadd.f32 %v74, %v340
    %v342 = vpop.f32.mrb[0].mxu0
    %343 = vmatprep.mubr.f32.mxu0 0.0
    %344 = vmatmul.mubr.f32.gmra.mrb[0].mxu0 %v111
    %v345 = vpop.f32.mrb[0].mxu0
    %v346 = vadd.f32 %v74, %v345
    %v347 = vpop.f32.mrb[0].mxu0
    %348 = vmatprep.mubr.f32.mxu0 0.0
    %349 = vmatmul.mubr.f32.gmra.mrb[0].mxu0 %v114
    %v350 = vpop.f32.mrb[0].mxu0
    %v351 = vadd.f32 %v74, %v350
    %v352 = vpop.f32.mrb[0].mxu0
    %353 = vmatprep.mubr.f32.mxu0 0.0
    %354 = vmatmul.mubr.f32.gmra.mrb[0].mxu0 %v117
    %v355 = vpop.f32.mrb[0].mxu0
    %v356 = vadd.f32 %v74, %v355
    %v357 = vpop.f32.mrb[0].mxu0
    %358 = vmatprep.mubr.f32.mxu0 0.0
    %359 = vmatmul.mubr.f32.gmra.mrb[0].mxu0 %v120
    %v360 = vpop.f32.mrb[0].mxu0
    %v361 = vadd.f32 %v74, %v360
    %v362 = vpop.f32.mrb[0].mxu0
    %363 = vmatprep.mubr.f32.mxu0 0.0
    %364 = vmatmul.mubr.f32.gmra.mrb[0].mxu0 %v123
    %v365 = vpop.f32.mrb[0].mxu0
    %v366 = vadd.f32 %v74, %v365
    %v367 = vpop.f32.mrb[0].mxu0
    %368 = vmatprep.mubr.f32.mxu0 0.0
    %369 = vmatmul.mubr.f32.gmra.mrb[0].mxu0 %v126
    %v370 = vpop.f32.mrb[0].mxu0
    %v371 = vadd.f32 %v74, %v370
    %v372 = vpop.f32.mrb[0].mxu0
    %373 = vmatprep.mubr.f32.mxu0 0.0
    %374 = vmatmul.mubr.f32.gmra.mrb[0].mxu0 %v129
    %v375 = vpop.f32.mrb[0].mxu0
    %v376 = vadd.f32 %v74, %v375
    %v377 = vpop.f32.mrb[0].mxu0
    %378 = vmatprep.mubr.f32.mxu0 0.0
    %379 = vmatmul.mubr.f32.gmra.mrb[0].mxu0 %v132
    %v380 = vpop.f32.mrb[0].mxu0
    %v381 = vadd.f32 %v74, %v380
    %v382 = vpop.f32.mrb[0].mxu0
    %383 = vmatprep.mubr.f32.mxu0 0.0
    %384 = vmatmul.mubr.f32.gmra.mrb[0].mxu0 %v135
    %v385 = vpop.f32.mrb[0].mxu0
    %v386 = vadd.f32 %v74, %v385
    %v387 = vpop.f32.mrb[0].mxu0
    %388 = vmatprep.mubr.f32.mxu0 0.0
    %389 = vmatmul.mubr.f32.gmra.mrb[0].mxu0 %v138
    %v390 = vpop.f32.mrb[0].mxu0
    %v391 = vadd.f32 %v74, %v390
    %v392 = vpop.f32.mrb[0].mxu0
    %393 = vmatprep.mubr.f32.mxu0 0.0
    %394 = vmatmul.mubr.f32.gmra.mrb[0].mxu0 %v141
    %v395 = vpop.f32.mrb[0].mxu0
    %v396 = vadd.f32 %v74, %v395
    %v397 = vpop.f32.mrb[0].mxu0
    %398 = vmatprep.mubr.f32.mxu0 0.0
    %399 = vmatmul.mubr.f32.gmra.mrb[0].mxu0 %v144
    %v400 = vpop.f32.mrb[0].mxu0
    %v401 = vadd.f32 %v74, %v400
    %v402 = vpop.f32.mrb[0].mxu0
    %403 = vmatprep.mubr.f32.mxu0 0.0
    %404 = vmatmul.mubr.f32.gmra.mrb[0].mxu0 %v147
    %v405 = vpop.f32.mrb[0].mxu0
    %v406 = vadd.f32 %v74, %v405
    %v407 = vpop.f32.mrb[0].mxu0
    %408 = vmatprep.mubr.f32.mxu0 0.0
    %409 = vmatmul.mubr.f32.gmra.mrb[0].mxu0 %v150
    %v410 = vpop.f32.mrb[0].mxu0
    %v411 = vadd.f32 %v74, %v410
    %v412 = vpop.f32.mrb[0].mxu0
    %413 = vmatprep.mubr.f32.mxu0 0.0
    %414 = vmatmul.mubr.f32.gmra.mrb[0].mxu0 %v153
    %v415 = vpop.f32.mrb[0].mxu0
    %v416 = vadd.f32 %v74, %v415
    %v417 = vpop.f32.mrb[0].mxu0
    %418 = vmatprep.mubr.f32.mxu0 0.0
    %419 = vmatmul.mubr.f32.gmra.mrb[0].mxu0 %v156
    %v420 = vpop.f32.mrb[0].mxu0
    %v421 = vadd.f32 %v74, %v420
    %v422 = vpop.f32.mrb[0].mxu0
    %423 = vmatprep.mubr.f32.mxu0 0.0
    %424 = vmatmul.mubr.f32.gmra.mrb[0].mxu0 %v159
    %v425 = vpop.f32.mrb[0].mxu0
    %v426 = vadd.f32 %v74, %v425
    %v427 = vpop.f32.mrb[0].mxu0
    %428 = vmatprep.mubr.f32.mxu0 0.0
    %429 = vmatmul.mubr.f32.gmra.mrb[0].mxu0 %v162
    %v430 = vpop.f32.mrb[0].mxu0
    %v431 = vadd.f32 %v74, %v430
    %v432 = vpop.f32.mrb[0].mxu0
    %433 = vmatprep.mubr.f32.mxu0 0.0
    %434 = vmatmul.mubr.f32.gmra.mrb[0].mxu0 %v165
    %v435 = vpop.f32.mrb[0].mxu0
    %v436 = vadd.f32 %v74, %v435
    %v437 = vpop.f32.mrb[0].mxu0
    %438 = vmatprep.mubr.f32.mxu0 0.0
    %439 = vmatmul.mubr.f32.gmra.mrb[0].mxu0 %v168
    %v440 = vpop.f32.mrb[0].mxu0
    %v441 = vadd.f32 %v74, %v440
    %v442 = vpop.f32.mrb[0].mxu0
    %443 = vmatprep.mubr.f32.mxu0 0.0
    %444 = vmatmul.mubr.f32.gmra.mrb[0].mxu0 %v171
    %v445 = vpop.f32.mrb[0].mxu0
    %v446 = vadd.f32 %v74, %v445
    %v447 = vpop.f32.mrb[0].mxu0
    %448 = vmatprep.mubr.f32.mxu0 0.0
    %449 = vmatmul.mubr.f32.gmra.mrb[0].mxu0 %v174
    %v450 = vpop.f32.mrb[0].mxu0
    %v451 = vadd.f32 %v74, %v450
    %v452 = vpop.f32.mrb[0].mxu0
    %453 = vmatprep.mubr.f32.mxu0 0.0
    %454 = vmatmul.mubr.f32.gmra.mrb[0].mxu0 %v177
    %v455 = vpop.f32.mrb[0].mxu0
    %v456 = vadd.f32 %v74, %v455
    %v457 = vpop.f32.mrb[0].mxu0
    %458 = vmatprep.mubr.f32.mxu0 0.0
    %459 = vmatmul.mubr.f32.gmra.mrb[0].mxu0 %v180
    %v460 = vpop.f32.mrb[0].mxu0
    %v461 = vadd.f32 %v74, %v460
    %v462 = vpop.f32.mrb[0].mxu0
    %463 = vmatprep.mubr.f32.mxu0 0.0
    %464 = vmatmul.mubr.f32.gmra.mrb[0].mxu0 %v183
    %v465 = vpop.f32.mrb[0].mxu0
    %v466 = vadd.f32 %v74, %v465
    %v467 = vpop.f32.mrb[0].mxu0
    %468 = vmatprep.mubr.f32.mxu0 0.0
    %469 = vmatmul.mubr.f32.gmra.mrb[0].mxu0 %v186
    %v470 = vpop.f32.mrb[0].mxu0
    %v471 = vadd.f32 %v74, %v470
    %v472 = vpop.f32.mrb[0].mxu0
    %473 = vmatprep.mubr.f32.mxu0 0.0
    %474 = vmatmul.mubr.f32.gmra.mrb[0].mxu0 %v189
    %v475 = vpop.f32.mrb[0].mxu0
    %v476 = vadd.f32 %v74, %v475
    %v477 = vpop.f32.mrb[0].mxu0
    %478 = vmatprep.mubr.f32.mxu0 0.0
    %479 = vmatmul.mubr.f32.gmra.mrb[0].mxu0 %v192
    %v480 = vpop.f32.mrb[0].mxu0
    %v481 = vadd.f32 %v74, %v480
    %v482 = vpop.f32.mrb[0].mxu0
    %483 = vmatprep.mubr.f32.mxu0 0.0
    %484 = vmatmul.mubr.f32.gmra.mrb[0].mxu0 %v195
    %v485 = vpop.f32.mrb[0].mxu0
    %v486 = vadd.f32 %v74, %v485
    %v487 = vpop.f32.mrb[0].mxu0
    %488 = vmatprep.mubr.f32.mxu0 0.0
    %489 = vmatmul.mubr.f32.gmra.mrb[0].mxu0 %v198
    %v490 = vpop.f32.mrb[0].mxu0
    %v491 = vadd.f32 %v74, %v490
    %v492 = vpop.f32.mrb[0].mxu0
    %493 = vmatprep.mubr.f32.mxu0 0.0
    %494 = vmatmul.mubr.f32.gmra.mrb[0].mxu0 %v201
    %v495 = vpop.f32.mrb[0].mxu0
    %v496 = vadd.f32 %v74, %v495
    %v497 = vpop.f32.mrb[0].mxu0
    %498 = vmatprep.mubr.f32.mxu0 0.0
    %499 = vmatmul.mubr.f32.gmra.mrb[0].mxu0 %v204
    %v500 = vpop.f32.mrb[0].mxu0
    %v501 = vadd.f32 %v74, %v500
    %v502 = vpop.f32.mrb[0].mxu0
    %503 = vmatprep.mubr.f32.mxu0 0.0
    %504 = vmatmul.mubr.f32.gmra.mrb[0].mxu0 %v207
    %v505 = vpop.f32.mrb[0].mxu0
    %v506 = vadd.f32 %v74, %v505
    %v507 = vpop.f32.mrb[0].mxu0
    %508 = vmatprep.mubr.f32.mxu0 0.0
    %509 = vmatmul.mubr.f32.gmra.mrb[0].mxu0 %v210
    %v510 = vpop.f32.mrb[0].mxu0
    %v511 = vadd.f32 %v74, %v510
    %v512 = vpop.f32.mrb[0].mxu0
    %513 = vmatprep.mubr.f32.mxu0 0.0
    %514 = vmatmul.mubr.f32.gmra.mrb[0].mxu0 %v213
    %v515 = vpop.f32.mrb[0].mxu0
    %v516 = vadd.f32 %v74, %v515
    %v517 = vpop.f32.mrb[0].mxu0
    %518 = vmatprep.mubr.f32.mxu0 0.0
    %519 = vmatmul.mubr.f32.gmra.mrb[0].mxu0 %v216
    %v520 = vpop.f32.mrb[0].mxu0
    %v521 = vadd.f32 %v74, %v520
    %v522 = vpop.f32.mrb[0].mxu0
    %523 = vmatprep.mubr.f32.mxu0 0.0
    %524 = vmatmul.mubr.f32.gmra.mrb[0].mxu0 %v219
    %v525 = vpop.f32.mrb[0].mxu0
    %v526 = vadd.f32 %v74, %v525
    %v527 = vpop.f32.mrb[0].mxu0
    %528 = vmatprep.mubr.f32.mxu0 0.0
    %529 = vmatmul.mubr.f32.gmra.mrb[0].mxu0 %v222
    %v530 = vpop.f32.mrb[0].mxu0
    %v531 = vadd.f32 %v74, %v530
    %v532 = vpop.f32.mrb[0].mxu0
    %533 = vdwg.mxu0
    %v534 = vmax.f32 %v291, 0.0
    %v535 = vmax.f32 %v296, 0.0
    %v536 = vmax.f32 %v301, 0.0
    %v537 = vmax.f32 %v306, 0.0
    %v538 = vmax.f32 %v311, 0.0
    %v539 = vmax.f32 %v316, 0.0
    %v540 = vmax.f32 %v321, 0.0
    %v541 = vmax.f32 %v326, 0.0
    %v542 = vmax.f32 %v331, 0.0
    %v543 = vmax.f32 %v336, 0.0
    %v544 = vmax.f32 %v341, 0.0
    %v545 = vmax.f32 %v346, 0.0
    %v546 = vmax.f32 %v351, 0.0
    %v547 = vmax.f32 %v356, 0.0
    %v548 = vmax.f32 %v361, 0.0
    %v549 = vmax.f32 %v366, 0.0
    %v550 = vmax.f32 %v371, 0.0
    %v551 = vmax.f32 %v376, 0.0
    %v552 = vmax.f32 %v381, 0.0
    %v553 = vmax.f32 %v386, 0.0
    %v554 = vmax.f32 %v391, 0.0
    %v555 = vmax.f32 %v396, 0.0
    %v556 = vmax.f32 %v401, 0.0
    %v557 = vmax.f32 %v406, 0.0
    %v558 = vmax.f32 %v411, 0.0
    %v559 = vmax.f32 %v416, 0.0
    %v560 = vmax.f32 %v421, 0.0
    %v561 = vmax.f32 %v426, 0.0
    %v562 = vmax.f32 %v431, 0.0
    %v563 = vmax.f32 %v436, 0.0
    %v564 = vmax.f32 %v441, 0.0
    %v565 = vmax.f32 %v446, 0.0
    %v566 = vmax.f32 %v451, 0.0
    %v567 = vmax.f32 %v456, 0.0
    %v568 = vmax.f32 %v461, 0.0
    %v569 = vmax.f32 %v466, 0.0
    %v570 = vmax.f32 %v471, 0.0
    %v571 = vmax.f32 %v476, 0.0
    %v572 = vmax.f32 %v481, 0.0
    %v573 = vmax.f32 %v486, 0.0
    %v574 = vmax.f32 %v491, 0.0
    %v575 = vmax.f32 %v496, 0.0
    %v576 = vmax.f32 %v501, 0.0
    %v577 = vmax.f32 %v506, 0.0
    %v578 = vmax.f32 %v511, 0.0
    %v579 = vmax.f32 %v516, 0.0
    %v580 = vmax.f32 %v521, 0.0
    %v581 = vmax.f32 %v526, 0.0
    %v582 = vmax.f32 %v531, 0.0
    %583 = vst [vmem:[#allocation2] sm:$0xff] %v534
    %584 = vst [vmem:[#allocation2 + $0x8] sm:$0xff] %v535
    %585 = vst [vmem:[#allocation2 + $0x10] sm:$0xff] %v536
    %586 = vst [vmem:[#allocation2 + $0x18] sm:$0xff] %v537
    %587 = vst [vmem:[#allocation2 + $0x20] sm:$0xff] %v538
    %588 = vst [vmem:[#allocation2 + $0x28] sm:$0xff] %v539
    %589 = vst [vmem:[#allocation2 + $0x30] sm:$0xff] %v540
    %590 = vst [vmem:[#allocation2 + $0x38] sm:$0xff] %v541
    %591 = vst [vmem:[#allocation2 + $0x40] sm:$0xff] %v542
    %592 = vst [vmem:[#allocation2 + $0x48] sm:$0xff] %v543
    %593 = vst [vmem:[#allocation2 + $0x50] sm:$0xff] %v544
    %594 = vst [vmem:[#allocation2 + $0x58] sm:$0xff] %v545
    %595 = vst [vmem:[#allocation2 + $0x60] sm:$0xff] %v546
    %596 = vst [vmem:[#allocation2 + $0x68] sm:$0xff] %v547
    %597 = vst [vmem:[#allocation2 + $0x70] sm:$0xff] %v548
    %598 = vst [vmem:[#allocation2 + $0x78] sm:$0xff] %v549
    %599 = vst [vmem:[#allocation2 + $0x80] sm:$0xff] %v550
    %600 = vst [vmem:[#allocation2 + $0x88] sm:$0xff] %v551
    %601 = vst [vmem:[#allocation2 + $0x90] sm:$0xff] %v552
    %602 = vst [vmem:[#allocation2 + $0x98] sm:$0xff] %v553
    %603 = vst [vmem:[#allocation2 + $0xa0] sm:$0xff] %v554
    %604 = vst [vmem:[#allocation2 + $0xa8] sm:$0xff] %v555
    %605 = vst [vmem:[#allocation2 + $0xb0] sm:$0xff] %v556
    %606 = vst [vmem:[#allocation2 + $0xb8] sm:$0xff] %v557
    %607 = vst [vmem:[#allocation2 + $0xc0] sm:$0xff] %v558
    %608 = vst [vmem:[#allocation2 + $0xc8] sm:$0xff] %v559
    %609 = vst [vmem:[#allocation2 + $0xd0] sm:$0xff] %v560
    %610 = vst [vmem:[#allocation2 + $0xd8] sm:$0xff] %v561
    %611 = vst [vmem:[#allocation2 + $0xe0] sm:$0xff] %v562
    %612 = vst [vmem:[#allocation2 + $0xe8] sm:$0xff] %v563
    %613 = vst [vmem:[#allocation2 + $0xf0] sm:$0xff] %v564
    %614 = vst [vmem:[#allocation2 + $0xf8] sm:$0xff] %v565
    %615 = vst [vmem:[#allocation2 + $0x100] sm:$0xff] %v566
    %616 = vst [vmem:[#allocation2 + $0x108] sm:$0xff] %v567
    %617 = vst [vmem:[#allocation2 + $0x110] sm:$0xff] %v568
    %618 = vst [vmem:[#allocation2 + $0x118] sm:$0xff] %v569
    %619 = vst [vmem:[#allocation2 + $0x120] sm:$0xff] %v570
    %620 = vst [vmem:[#allocation2 + $0x128] sm:$0xff] %v571
    %621 = vst [vmem:[#allocation2 + $0x130] sm:$0xff] %v572
    %622 = vst [vmem:[#allocation2 + $0x138] sm:$0xff] %v573
    %623 = vst [vmem:[#allocation2 + $0x140] sm:$0xff] %v574
    %624 = vst [vmem:[#allocation2 + $0x148] sm:$0xff] %v575
    %625 = vst [vmem:[#allocation2 + $0x150] sm:$0xff] %v576
    %626 = vst [vmem:[#allocation2 + $0x158] sm:$0xff] %v577
    %627 = vst [vmem:[#allocation2 + $0x160] sm:$0xff] %v578
    %628 = vst [vmem:[#allocation2 + $0x168] sm:$0xff] %v579
    %629 = vst [vmem:[#allocation2 + $0x170] sm:$0xff] %v580
    %630 = vst [vmem:[#allocation2 + $0x178] sm:$0xff] %v581
    %631 = vst [vmem:[#allocation2 + $0x180] sm:$0xff] %v582
    // Predicated region
    $region14: #{tpu_custom_call.1} parent=1 // pred_check
      _
    $region15: #{tpu_custom_call.1} parent=1 // pred_check_branch
      %633 = sbr.rel (0) target = $region17
    $region16: #{tpu_custom_call.1} parent=1 // pred_region
      %s635 = ssub.s32 6272, 6272
      %636 = vsyncadd [#allocation3], %s635
      %s637 = sshll.u32 [#allocation2], 4
      %s638 = int_to_ptr.vmem [resolvable:$true] %s637
      %643 = dma.vmem_to_hbm [thread:$0]  %s638, 6272, %s3, [#allocation3], 128, 128, 8
    $region17: #{tpu_custom_call.1} parent=1 // pred_fallthru
      _
    // Predicated region
    $region18: #{tpu_custom_call.1} parent=1 // pred_check
      _
    $region19: #{tpu_custom_call.1} parent=1 // pred_check_branch
      %645 = sbr.rel (0) target = $region21
    $region20: #{tpu_custom_call.1} parent=1 // pred_region
      %646 = dma.done [#allocation3], 6272
    $region21: #{tpu_custom_call.1} parent=1 // pred_fallthru
      _
    %647 = vsyncpa [#allocation3], 1

</llo_original>
